<compile_context>
chip_gen: v6e
topology: v6e:2x2x1
jax: 0.10.0
libtpu: 0.0.40
codegen_flags: <defaults>
</compile_context>

<pallas_src>
import math
import jax
import jax.numpy as jnp
from jax.experimental import pallas as pl
from jax.experimental.pallas import tpu as pltpu


_LANE = 128
_SUBLANE = 8
# Explicit scoped-VMEM limit: comfortably inside v7x's 64 MiB physical VMEM,
# well above what the ~2 MiB blocks below actually need.
_VMEM_LIMIT_BYTES = 48 * 1024 * 1024
# Target bytes per data block; (x + pe + out) blocks x 2 pipeline buffers ~= 12 MiB.
_TARGET_BLOCK_BYTES = 2 * 1024 * 1024


def make_sinusoidal_pe(max_len: int, d_model: int, dtype=jnp.float32) -> jnp.ndarray:
    """Build the (max_len, d_model) sinusoidal PE table (plain JAX parameter setup)."""
    assert d_model % 2 == 0, "sinusoidal PE assumes an even d_model (ESPnet convention)"
    position = jnp.arange(0, max_len, dtype=jnp.float32)[:, None]           # (max_len, 1)
    div_term = jnp.exp(
        jnp.arange(0, d_model, 2, dtype=jnp.float32) * -(math.log(10000.0) / d_model)
    )                                                                        # (d_model//2,)
    angles = position * div_term                                             # (max_len, d_model//2)
    pe = jnp.zeros((max_len, d_model), dtype=jnp.float32)
    pe = pe.at[:, 0::2].set(jnp.sin(angles))
    pe = pe.at[:, 1::2].set(jnp.cos(angles))
    return pe.astype(dtype)


def _scaled_pe_kernel(alpha_ref, x_ref, pe_ref, o_ref):
    """out = x + alpha * pe, computed in f32, cast at the store.

    Works for both layouts via broadcasting:
      3-D path: x (1, tT, D) + pe (tT, D)
      2-D path: x (B, tC)    + pe (1, tC)
    """
    alpha = alpha_ref[0]  # float32 SMEM scalar
    o_ref[...] = (
        x_ref[...].astype(jnp.float32) + alpha * pe_ref[...].astype(jnp.float32)
    ).astype(o_ref.dtype)


def _round_down(v: int, m: int) -> int:
    return max(m, (v // m) * m)


def _choose_row_tile(T: int, D: int, itemsize: int) -> int:
    """Time-tile rows: ~_TARGET_BLOCK_BYTES per block, multiple of 8, or full T."""
    rows = max(_SUBLANE, _TARGET_BLOCK_BYTES // max(1, D * itemsize))
    if rows >= T:
        return T
    return min(T, _round_down(rows, _SUBLANE))


def _choose_col_tile(C: int, B: int, itemsize: int) -> int:
    """Lane tile for the flattened (B, T*D) path: multiple of 128, or full C."""
    cols = max(_LANE, _TARGET_BLOCK_BYTES // max(1, B * itemsize))
    if cols >= C:
        return C
    return min(C, _round_down(cols, _LANE))


def scaled_positional_encoding(x: jnp.ndarray,
                               pe_table: jnp.ndarray,
                               alpha,
                               *,
                               donate_x: bool = False) -> jnp.ndarray:
    """Eval-mode ScaledPositionalEncoding forward: out = x + alpha * pe_table[:T].

    x: (B, T, D); pe_table: (max_len, D); alpha: scalar (kept in float32).
    donate_x=True aliases x's HBM buffer to the output (only if x is not needed later).
    """
    B, T, D = x.shape
    max_len, d_pe = pe_table.shape
    assert d_pe == D and max_len >= T
    itemsize = jnp.dtype(x.dtype).itemsize
    alpha_arr = jnp.asarray(alpha, dtype=jnp.float32).reshape((1,))
    io_alias = {1: 0} if donate_x else {}

    # TODO(synk): nn.Dropout in training mode is not implemented (eval-mode identity).

    C = T * D
    use_flat = (D % _LANE != 0) and (C % _LANE == 0)

    if not use_flat:
        # 3-D path: lane-dense D (or unavoidable fallback). Tile the time axis;
        # grid = (time_tile, batch) keeps the pe block resident across the batch loop.
        tT = _choose_row_tile(T, D, itemsize)
        grid = (pl.cdiv(T, tT), B)
        return pl.pallas_call(
            _scaled_pe_kernel,
            out_shape=jax.ShapeDtypeStruct((B, T, D), x.dtype),
            grid_spec=pltpu.PrefetchScalarGridSpec(
                num_scalar_prefetch=0,
                grid=grid,
                in_specs=[
                    pl.BlockSpec(memory_space=pltpu.MemorySpace.SMEM),   # alpha (f32 scalar)
                    pl.BlockSpec((1, tT, D), lambda t, b: (b, t, 0)),    # x tile
                    pl.BlockSpec((tT, D), lambda t, b: (t, 0)),          # pe tile (resident over b)
                ],
                out_specs=pl.BlockSpec((1, tT, D), lambda t, b: (b, t, 0)),
            ),
            compiler_params=pltpu.CompilerParams(
                dimension_semantics=("parallel", "parallel"),
                vmem_limit_bytes=_VMEM_LIMIT_BYTES,
            ),
            input_output_aliases=io_alias,
        )(alpha_arr, x, pe_table)

    # 2-D lane-dense path: D < 128 / not a multiple of 128 but T*D is.
    # Flatten to (B, T*D) so the output last dim is a large multiple of 128
    # (unmasked vector stores); pe broadcasts (1, tC) + (B, tC).
    x2 = x.reshape(B, C)
    pe2 = pe_table[:T, :].reshape(1, C)
    tC = _choose_col_tile(C, B, itemsize)
    grid = (pl.cdiv(C, tC),)
    out2 = pl.pallas_call(
        _scaled_pe_kernel,
        out_shape=jax.ShapeDtypeStruct((B, C), x.dtype),
        grid_spec=pltpu.PrefetchScalarGridSpec(
            num_scalar_prefetch=0,
            grid=grid,
            in_specs=[
                pl.BlockSpec(memory_space=pltpu.MemorySpace.SMEM),   # alpha (f32 scalar)
                pl.BlockSpec((B, tC), lambda c: (0, c)),             # x slab (all batch rows)
                pl.BlockSpec((1, tC), lambda c: (0, c)),             # pe slab (broadcast over B)
            ],
            out_specs=pl.BlockSpec((B, tC), lambda c: (0, c)),
        ),
        compiler_params=pltpu.CompilerParams(
            dimension_semantics=("parallel",),
            vmem_limit_bytes=_VMEM_LIMIT_BYTES,
        ),
        input_output_aliases=io_alias,
    )(alpha_arr, x2, pe2)
    return out2.reshape(B, T, D)


if __name__ == "__main__":
    key = jax.random.PRNGKey(0)
    alpha = jnp.float32(1.0)  # matches the module's __init__ (alpha = 1.0)

    # Case 1: small speech-like d_model (D=32, not a multiple of 128) -> flattened lane-dense path.
    B, T, D = 2, 8, 32
    max_len = 64  # module default is 5000; a small table suffices for T=8
    k1, k2 = jax.random.split(key)
    x = jax.random.normal(k1, (B, T, D), dtype=jnp.float32)
    pe_table = make_sinusoidal_pe(max_len, D, dtype=x.dtype)
    out = jax.block_until_ready(scaled_positional_encoding(x, pe_table, alpha))
    ref = x + alpha * pe_table[None, :T, :]
    assert out.shape == (B, T, D)
    assert jnp.allclose(out, ref, atol=1e-6), "mismatch vs reference (flattened path)"

    # Case 2: lane-dense d_model (D=128) -> 3-D time-tiled path with resident pe.
    B2, T2, D2 = 2, 16, 128
    x_b = jax.random.normal(k2, (B2, T2, D2), dtype=jnp.float32)
    pe_b = make_sinusoidal_pe(max_len, D2, dtype=x_b.dtype)
    out_b = jax.block_until_ready(scaled_positional_encoding(x_b, pe_b, alpha))
    ref_b = x_b + alpha * pe_b[None, :T2, :]
    assert out_b.shape == (B2, T2, D2)
    assert jnp.allclose(out_b, ref_b, atol=1e-6), "mismatch vs reference (3-D path)"

    print("KERNEL_OK")
</pallas_src>

<mosaic_0001>
module attributes {stable_mosaic.version = 11 : i64} {
  func.func @_scaled_pe_kernel(%arg0: i32, %arg1: memref<1xf32, #tpu.memory_space<smem>>, %arg2: memref<2x256xf32, #tpu.memory_space<vmem>>, %arg3: memref<1x256xf32, #tpu.memory_space<vmem>>, %arg4: memref<2x256xf32, #tpu.memory_space<vmem>>) attributes {dimension_semantics = [#tpu.dimension_semantics<parallel>], iteration_bounds = array<i64: 1>, scalar_prefetch = 0 : i64, scratch_operands = 0 : i64, tpu.core_type = #tpu.core_type<tc>, window_params = [{transform_indices = @transform_0, window_bounds = array<i64: 1>}, {transform_indices = @transform_1, window_bounds = array<i64: 2, 256>}, {transform_indices = @transform_2, window_bounds = array<i64: 1, 256>}, {transform_indices = @transform_3, window_bounds = array<i64: 2, 256>}]} {
    %c0 = arith.constant 0 : index
    %0 = memref.load %arg1[%c0] : memref<1xf32, #tpu.memory_space<smem>>
    %c0_0 = arith.constant 0 : index
    %c0_1 = arith.constant 0 : index
    %1 = vector.load %arg2[%c0_0, %c0_1] : memref<2x256xf32, #tpu.memory_space<vmem>>, vector<2x256xf32>
    %c0_2 = arith.constant 0 : index
    %c0_3 = arith.constant 0 : index
    %2 = vector.load %arg3[%c0_2, %c0_3] : memref<1x256xf32, #tpu.memory_space<vmem>>, vector<1x256xf32>
    %3 = vector.broadcast %0 : f32 to vector<1x256xf32>
    %4 = arith.mulf %3, %2 : vector<1x256xf32>
    %5 = vector.broadcast %4 : vector<1x256xf32> to vector<2x256xf32>
    %6 = arith.addf %1, %5 : vector<2x256xf32>
    %c0_4 = arith.constant 0 : index
    %c0_5 = arith.constant 0 : index
    %7 = vector.load %arg4[%c0_4, %c0_5] : memref<2x256xf32, #tpu.memory_space<vmem>>, vector<2x256xf32>
    tpu.vector_store %arg4[%c0_4, %c0_5], %6 {strides = array<i32>} : memref<2x256xf32, #tpu.memory_space<vmem>>, vector<2x256xf32>,
    return
  }
  func.func @transform_0(%arg0: i32) -> i32 {
    %c0_i32 = arith.constant 0 : i32
    %c0_i32_0 = arith.constant 0 : i32
    return %c0_i32 : i32
  }
  func.func @transform_1(%arg0: i32) -> (i32, i32) {
    %c0_i32 = arith.constant 0 : i32
    %c0_i32_0 = arith.constant 0 : i32
    return %c0_i32, %arg0 : i32, i32
  }
  func.func @transform_2(%arg0: i32) -> (i32, i32) {
    %c0_i32 = arith.constant 0 : i32
    %c0_i32_0 = arith.constant 0 : i32
    return %c0_i32, %arg0 : i32, i32
  }
  func.func @transform_3(%arg0: i32) -> (i32, i32) {
    %c0_i32 = arith.constant 0 : i32
    %c0_i32_0 = arith.constant 0 : i32
    return %c0_i32, %arg0 : i32, i32
  }
}

</mosaic_0001>

<llo_original>
// kernel: tpu_custom_call.1
$region0: #{tpu_custom_call.1}
  #allocation0 [shape = 'u32[]', space=smem, size = 0x4, offset = 0x4, fixed_abs, tag = 'smem constant byte address 0x4 - core index']
  #allocation1 [shape = 'u32[144,128]{1,0:T(1,128)}', space=vmem, size = 0x12000, scoped, tag = 'internal scratch']
  #allocation2 [shape = 'f32[1]{0:T(128)S(6)}', space=smem, size = 0x200, scoped, tag = 'scoped memory for tpu_custom_call.1']
  %s0 = inlined_call_operand.<no memory space> [shape: f32[1], index: 0, kind: input, shape index: {}]
  %s1 = inlined_call_operand.hbm [shape: f32[2,256], index: 1, kind: input, shape index: {}]
  %s2 = inlined_call_operand.vmem [shape: f32[1,256], index: 2, kind: input, shape index: {}]
  %s3 = inlined_call_operand.hbm [shape: f32[2,256], index: 3, kind: output, shape index: {}]
  %s4 = sld [smem:[#allocation0]]
  $region26: #{tpu_custom_call.1} parent=0
    _
  %s6 = ssub.s32 1, %s4
  %s7 = scalar_select 0, %s6, %s4
  %8 = sst [smem:[#allocation2]] %s0
  $region1: #{tpu_custom_call.1} parent=0
    #allocation3 [shape = 'u8[2048]{0}', space=vmem, size = 0x800, scoped, tag = 'input window, operand 1, single buffered']
    #allocation4 [shape = 's32[1]{0}', space=sflag, size = 0x4, scoped, tag = 'scoped memory for tpu_custom_call.1']
    #allocation5 [shape = 's32[1]{0}', space=sflag, size = 0x4, scoped, tag = 'scoped memory for tpu_custom_call.1']
    #allocation6 [shape = 'u8[2048]{0}', space=vmem, size = 0x800, scoped, tag = 'output window, operand 0, single buffered']
    %9 = vsyncpa [#allocation4], 0
    %10 = vsyncpa [#allocation5], 0
    // Predicated region
    $region2: #{tpu_custom_call.1} parent=1 // pred_check
      _
    $region3: #{tpu_custom_call.1} parent=1 // pred_check_branch
      %12 = sbr.rel (0) target = $region5
    $region4: #{tpu_custom_call.1} parent=1 // pred_region
      _
    $region5: #{tpu_custom_call.1} parent=1 // pred_fallthru
      _
    // Predicated region
    $region6: #{tpu_custom_call.1} parent=1 // pred_check
      _
    $region7: #{tpu_custom_call.1} parent=1 // pred_check_branch
      %14 = sbr.rel (0) target = $region9
    $region8: #{tpu_custom_call.1} parent=1 // pred_region
      %s16 = ssub.s32 64, 64
      %17 = vsyncadd [#allocation4], %s16
      %s19 = sshll.u32 [#allocation3], 4
      %s20 = int_to_ptr.vmem [resolvable:$true] %s19
      %22 = dma.hbm_to_vmem [thread:$0]  %s1, 64, %s20, [#allocation4]
    $region9: #{tpu_custom_call.1} parent=1 // pred_fallthru
      _
    // Predicated region
    $region10: #{tpu_custom_call.1} parent=1 // pred_check
      _
    $region11: #{tpu_custom_call.1} parent=1 // pred_check_branch
      %24 = sbr.rel (0) target = $region13
    $region12: #{tpu_custom_call.1} parent=1 // pred_region
      _
    $region13: #{tpu_custom_call.1} parent=1 // pred_fallthru
      _
    // Predicated region
    $region14: #{tpu_custom_call.1} parent=1 // pred_check
      _
    $region15: #{tpu_custom_call.1} parent=1 // pred_check_branch
      %26 = sbr.rel (0) target = $region17
    $region16: #{tpu_custom_call.1} parent=1 // pred_region
      %27 = dma.done [#allocation4], 64
    $region17: #{tpu_custom_call.1} parent=1 // pred_fallthru
      _
    %s28 = sld [smem:[#allocation2]]
    %v29 = vld [vmem:[#allocation3] sm:$0xf]
    %v30 = vld [vmem:[%s2] sm:$0x3]
    %v31 = vstv %s28
    %v32 = vmul.f32 %v31, %v30
    %v34 = vlaneseq
    %v35 = vshrl.u32 %v34, 7
    %v36 = vsub.s32 0, %v35
    %v37 = vrot.slane %v32, %v36
    %v38 = vlaneseq
    %v39 = vshrl.u32 %v38, 7
    %v40 = vsub.s32 1, %v39
    %v41 = vrot.slane %v32, %v40
    %v42 = vcombine.low %v37, %v41
    %v44 = vunpack.c.l.s4 1983009808
    %v45 = vunpack.c.0.s8 %v44
    %v46 = vlaneseq
    %v47 = vshrl.u32 %v46, 7
    %v48 = vsub.s32 %v45, %v47
    %v49 = vrot.slane %v42, %v48
    %v51 = vadd.f32 %v29, %v49
    %52 = vst [vmem:[#allocation6] sm:$0xf] %v51
    // Predicated region
    $region18: #{tpu_custom_call.1} parent=1 // pred_check
      _
    $region19: #{tpu_custom_call.1} parent=1 // pred_check_branch
      %54 = sbr.rel (0) target = $region21
    $region20: #{tpu_custom_call.1} parent=1 // pred_region
      %s56 = ssub.s32 64, 64
      %57 = vsyncadd [#allocation5], %s56
      %s59 = sshll.u32 [#allocation6], 4
      %s60 = int_to_ptr.vmem [resolvable:$true] %s59
      %62 = dma.vmem_to_hbm [thread:$0]  %s60, 64, %s3, [#allocation5]
    $region21: #{tpu_custom_call.1} parent=1 // pred_fallthru
      _
    // Predicated region
    $region22: #{tpu_custom_call.1} parent=1 // pred_check
      _
    $region23: #{tpu_custom_call.1} parent=1 // pred_check_branch
      %64 = sbr.rel (0) target = $region25
    $region24: #{tpu_custom_call.1} parent=1 // pred_region
      %65 = dma.done [#allocation5], 64
    $region25: #{tpu_custom_call.1} parent=1 // pred_fallthru
      _
    %66 = vsyncpa [#allocation4], 1
    %67 = vsyncpa [#allocation5], 1

</llo_original>
